<compile_context>
chip_gen: v5e
topology: v5e:2x2
jax: 0.10.0
libtpu: 0.0.40
codegen_flags: <defaults>
</compile_context>

<pallas_src>
import math
from functools import partial

import jax
import jax.numpy as jnp
from jax.experimental import pallas as pl
from jax.experimental.pallas import tpu as pltpu


# Below this many elements a Pallas launch is not worth it (tune upward in
# production; kept small here so the demo exercises both paths).
_SMALL_LEAF_ELEMENTS = 1024


def _round_up(x, m):
    return ((x + m - 1) // m) * m


def _vmem_capacity_bytes():
    try:
        return int(pltpu.get_tpu_info().vmem_capacity_bytes)
    except Exception:
        return 64 << 20  # conservative fallback: v7x per-TensorCore VMEM


# -----------------------------------------------------------------------------
# Pallas kernel: the elementwise normalize / unnormalize hot path.
# -----------------------------------------------------------------------------
def _running_norm_kernel(x_ref, mean_ref, scale_ref, o_ref, *, unnorm):
    x = x_ref[...].astype(jnp.float32)          # data.float()
    m = mean_ref[...]                           # (1, tf) broadcasts over rows
    s = scale_ref[...]                          # std+eps (unnorm) or 1/(std+eps)
    if unnorm:
        o_ref[...] = (x * s + m).astype(o_ref.dtype)   # data * (std + eps) + mean
    else:
        o_ref[...] = ((x - m) * s).astype(o_ref.dtype) # (data - mean) * 1/(std + eps)


def running_norm_forward(x, mean_row, scale_row, *, unnorm=False,
                         out_dtype=jnp.float32):
    """Apply RunningNorm.forward on a (B, *space) array.

    mean_row / scale_row are precomputed (1, F) float32 rows (scale_row is
    std+eps for unnorm, 1/(std+eps) for normalize).
    """
    space_shape = tuple(x.shape[1:])
    b = x.shape[0]
    f = int(math.prod(space_shape)) if space_shape else 1
    assert mean_row.shape == (1, f) and scale_row.shape == (1, f)

    x2 = x.reshape(b, f)

    # Fast path for tiny leaves: launch + layout overhead dominates.
    # TODO(synk): fuse all Box leaves of the nested structure into one
    # (B, sum F) slab + single pallas_call to amortize launches further.
    if b * f < _SMALL_LEAF_ELEMENTS:
        xf = x2.astype(jnp.float32)
        out = xf * scale_row + mean_row if unnorm else (xf - mean_row) * scale_row
        return out.astype(out_dtype).reshape((b,) + space_shape)

    # --- generation-aware tile sizing ------------------------------------
    vmem_cap = _vmem_capacity_bytes()
    if vmem_cap >= (100 << 20):          # v5e / v6e: 128 MiB physical VMEM
        tile_bytes_target = 16 << 20
        vmem_clamp = 96 << 20
    else:                                # v7x: 64 MiB physical VMEM
        tile_bytes_target = 8 << 20
        vmem_clamp = 48 << 20
    tile_elems = tile_bytes_target // 4  # budget counted in f32 elements

    f_pad = _round_up(f, 128)            # VMEM lane padding for footprint math
    if 8 * f_pad <= tile_elems:
        # Whole feature extent per block (legal: block dim == full array dim).
        tf = f
        tb = max(8, (tile_elems // f_pad) // 8 * 8)
        tb = min(tb, _round_up(b, 8))
    else:
        # Very large F: tile the lane axis too (multiple of 128, edge masked).
        tf = max(128, (tile_elems // 8) // 128 * 128)
        tb = 8

    nb, nf = pl.cdiv(b, tb), pl.cdiv(f, tf)

    # v7x megacore: expose >= 2 grid steps so both TensorCores get work.
    if nb * nf < 2:
        if b > 8:
            tb = _round_up(pl.cdiv(b, 2), 8)
            nb = pl.cdiv(b, tb)
        elif f > 128:
            tf = _round_up(pl.cdiv(f, 2), 128)
            nf = pl.cdiv(f, tf)

    x_itemsize = x2.dtype.itemsize
    out_itemsize = jnp.dtype(out_dtype).itemsize
    tf_pad = _round_up(tf, 128)
    # Double-buffered x + out tiles, double-buffered mean/scale rows, slack.
    footprint = (2 * tb * tf_pad * (x_itemsize + out_itemsize)
                 + 2 * 2 * 8 * tf_pad * 4
                 + (1 << 20))
    vmem_limit = int(min(max(2 * footprint, 16 << 20), vmem_clamp))

    out = pl.pallas_call(
        partial(_running_norm_kernel, unnorm=unnorm),
        out_shape=jax.ShapeDtypeStruct((b, f), out_dtype),
        grid=(nb, nf),
        in_specs=[
            pl.BlockSpec((tb, tf), lambda i, j: (i, j)),   # x: (batch, feat)-tiled
            pl.BlockSpec((1, tf), lambda i, j: (0, j)),    # mean row
            pl.BlockSpec((1, tf), lambda i, j: (0, j)),    # scale row
        ],
        out_specs=pl.BlockSpec((tb, tf), lambda i, j: (i, j)),
        compiler_params=pltpu.CompilerParams(
            dimension_semantics=("parallel", "parallel"),
            vmem_limit_bytes=vmem_limit,
        ),
        cost_estimate=pl.CostEstimate(
            flops=2 * b * f,
            transcendentals=0,
            bytes_accessed=b * f * (x_itemsize + out_itemsize) + 2 * f * 4,
        ),
    )(x2, mean_row, scale_row)

    return out.reshape((b,) + space_shape)


# -----------------------------------------------------------------------------
# Plain-JAX glue replicating the PyTorch module structure (no gym / nest deps).
# -----------------------------------------------------------------------------
class Box:
    def __init__(self, shape):
        self.shape = tuple(shape)


class Discrete:
    def __init__(self, n):
        self.n = n


def map_structure(fn, *structures):
    s0 = structures[0]
    if isinstance(s0, dict):
        return {k: map_structure(fn, *(s[k] for s in structures)) for k in s0}
    if isinstance(s0, (list, tuple)):
        return type(s0)(map_structure(fn, *zs) for zs in zip(*structures))
    return fn(*structures)


class RunningNormState:
    """RunningNorm's non-trainable parameters (zeros/ones per __init__)."""

    def __init__(self, shape, eps=1e-5):
        self.shape = tuple(shape)
        self.eps = eps
        self.mean = jnp.zeros(self.shape, jnp.float32)
        self.var = jnp.ones(self.shape, jnp.float32)
        self.count = jnp.zeros((1,), jnp.float32)
        self.std = jnp.ones(self.shape, jnp.float32)
        self._refresh_rows()

    def _refresh_rows(self):
        # Cached (1, F) rows; std+eps and its reciprocal are computed once per
        # update() rather than on every kernel grid step.
        f = int(math.prod(self.shape)) if self.shape else 1
        std_eps = (self.std.astype(jnp.float32) + self.eps).reshape(1, f)
        self._mean_row = self.mean.astype(jnp.float32).reshape(1, f)
        self._std_eps_row = std_eps
        self._inv_std_eps_row = 1.0 / std_eps

    def update(self, batch_mean, batch_var, batch_count):
        # Exact port of the torch.jit.script _update (not the forward hot path).
        delta = batch_mean - self.mean
        new_count = self.count + batch_count
        new_mean = self.mean + delta * (batch_count / new_count)
        new_var = self.count * self.var + batch_count * batch_var
        new_var = new_var + delta ** 2 * self.count * batch_count / new_count
        new_var = new_var / new_count
        self.mean, self.var, self.count = new_mean, new_var, new_count
        self.std = jnp.sqrt(new_var)
        self._refresh_rows()

    def forward(self, x, unnorm=False, out_dtype=jnp.float32):
        scale = self._std_eps_row if unnorm else self._inv_std_eps_row
        return running_norm_forward(x, self._mean_row, scale,
                                    unnorm=unnorm, out_dtype=out_dtype)


class NestedRunningNorm:
    """Running norm over an arbitrary nested observation structure."""

    def __init__(self, space_struct, eps=1e-5):
        self.eps = eps
        self.spaces = space_struct
        self.packed_norms = map_structure(self._make_norm, space_struct)

    def _make_norm(self, space):
        if isinstance(space, Box):
            return RunningNormState(space.shape, self.eps)
        return None

    def _norm(self, rn, x, unnorm=False):
        if rn is not None:
            return rn.forward(x, unnorm=unnorm)
        return x

    def __call__(self, data, unnorm=False):
        return map_structure(
            partial(self._norm, unnorm=unnorm), self.packed_norms, data
        )

    def update(self, batch_mean, batch_var, batch_count):
        def _upd(rn, bm, bv, bc):
            if rn is not None:
                rn.update(bm, bv, bc)
            return None

        map_structure(_upd, self.packed_norms, batch_mean, batch_var, batch_count)


# -----------------------------------------------------------------------------
# Demo / self-check.
# -----------------------------------------------------------------------------
if __name__ == "__main__":
    key = jax.random.PRNGKey(0)
    k1, k2, k3, k4, k5, k6 = jax.random.split(key, 6)

    # Nested "gym space": image Box (NCHW), vector Box, and a Discrete leaf.
    spaces = {
        "image": Box((4, 16, 16)),
        "vector": Box((32,)),
        "task_id": Discrete(5),
    }
    nrn = NestedRunningNorm(spaces, eps=1e-5)

    # One deterministic update so mean/std are non-trivial (plain-JAX glue).
    batch_mean = {
        "image": jax.random.normal(k1, (4, 16, 16), jnp.float32),
        "vector": jax.random.normal(k2, (32,), jnp.float32),
        "task_id": None,
    }
    batch_var = {
        "image": jax.random.uniform(k3, (4, 16, 16), jnp.float32, 0.5, 2.0),
        "vector": jax.random.uniform(k4, (32,), jnp.float32, 0.5, 2.0),
        "task_id": None,
    }
    batch_count = {"image": 16, "vector": 16, "task_id": None}
    nrn.update(batch_mean, batch_var, batch_count)

    # Batch of observations (batch=2).  The image leaf (2x4x16x16 = 2048 elems)
    # drives the Pallas kernel; the tiny vector leaf takes the small-leaf path.
    data = {
        "image": jax.random.normal(k5, (2, 4, 16, 16), jnp.float32),
        "vector": jax.random.normal(k6, (2, 32), jnp.float32),
        "task_id": jnp.array([1, 3], jnp.int32),
    }

    out = nrn(data)
    out = jax.block_until_ready(out)

    # Reference check (pure JAX, matches the PyTorch forward) vs kernel output.
    for name in ("image", "vector"):
        rn = nrn.packed_norms[name]
        ref = (data[name].astype(jnp.float32) - rn.mean) / (rn.std + nrn.eps)
        assert jnp.allclose(out[name], ref, atol=1e-5, rtol=1e-5), name
    assert jnp.array_equal(out["task_id"], data["task_id"])  # pass-through

    # Round-trip via unnorm path.
    back = nrn(out, unnorm=True)
    back = jax.block_until_ready(back)
    for name in ("image", "vector"):
        assert jnp.allclose(back[name], data[name].astype(jnp.float32),
                            atol=1e-4, rtol=1e-4), name

    print("KERNEL_OK")
</pallas_src>

<mosaic_0001>
module attributes {stable_mosaic.version = 11 : i64} {
  func.func @_running_norm_kernel(%arg0: i32, %arg1: i32, %arg2: memref<8x512xf32, #tpu.memory_space<vmem>>, %arg3: memref<1x512xf32, #tpu.memory_space<vmem>>, %arg4: memref<1x512xf32, #tpu.memory_space<vmem>>, %arg5: memref<8x512xf32, #tpu.memory_space<vmem>>) attributes {dimension_semantics = [#tpu.dimension_semantics<parallel>, #tpu.dimension_semantics<parallel>], iteration_bounds = array<i64: 1, 2>, scalar_prefetch = 0 : i64, scratch_operands = 0 : i64, tpu.core_type = #tpu.core_type<tc>, window_params = [{transform_indices = @transform_0, window_bounds = array<i64: 8, 512>}, {transform_indices = @transform_1, window_bounds = array<i64: 1, 512>}, {transform_indices = @transform_2, window_bounds = array<i64: 1, 512>}, {transform_indices = @transform_3, window_bounds = array<i64: 8, 512>}]} {
    %c0 = arith.constant 0 : index
    %c0_0 = arith.constant 0 : index
    %0 = vector.load %arg2[%c0, %c0_0] : memref<8x512xf32, #tpu.memory_space<vmem>>, vector<8x512xf32>
    %c0_1 = arith.constant 0 : index
    %c0_2 = arith.constant 0 : index
    %1 = vector.load %arg3[%c0_1, %c0_2] : memref<1x512xf32, #tpu.memory_space<vmem>>, vector<1x512xf32>
    %c0_3 = arith.constant 0 : index
    %c0_4 = arith.constant 0 : index
    %2 = vector.load %arg4[%c0_3, %c0_4] : memref<1x512xf32, #tpu.memory_space<vmem>>, vector<1x512xf32>
    %3 = vector.broadcast %1 : vector<1x512xf32> to vector<8x512xf32>
    %4 = arith.subf %0, %3 : vector<8x512xf32>
    %5 = vector.broadcast %2 : vector<1x512xf32> to vector<8x512xf32>
    %6 = arith.mulf %4, %5 : vector<8x512xf32>
    %c0_5 = arith.constant 0 : index
    %c0_6 = arith.constant 0 : index
    %7 = vector.load %arg5[%c0_5, %c0_6] : memref<8x512xf32, #tpu.memory_space<vmem>>, vector<8x512xf32>
    tpu.vector_store %arg5[%c0_5, %c0_6], %6 {strides = array<i32>} : memref<8x512xf32, #tpu.memory_space<vmem>>, vector<8x512xf32>,
    return
  }
  func.func @transform_0(%arg0: i32, %arg1: i32) -> (i32, i32) {
    %c0_i32 = arith.constant 0 : i32
    return %arg0, %arg1 : i32, i32
  }
  func.func @transform_1(%arg0: i32, %arg1: i32) -> (i32, i32) {
    %c0_i32 = arith.constant 0 : i32
    %c0_i32_0 = arith.constant 0 : i32
    return %c0_i32, %arg1 : i32, i32
  }
  func.func @transform_2(%arg0: i32, %arg1: i32) -> (i32, i32) {
    %c0_i32 = arith.constant 0 : i32
    %c0_i32_0 = arith.constant 0 : i32
    return %c0_i32, %arg1 : i32, i32
  }
  func.func @transform_3(%arg0: i32, %arg1: i32) -> (i32, i32) {
    %c0_i32 = arith.constant 0 : i32
    return %arg0, %arg1 : i32, i32
  }
}

</mosaic_0001>

<llo_original>
// kernel: tpu_custom_call.1
$region0: #{tpu_custom_call.1}
  #allocation0 [shape = 'u32[]', space=smem, size = 0x4, offset = 0x4, fixed_abs, tag = 'smem constant byte address 0x4 - core index']
  #allocation1 [shape = 'u32[72,128]{1,0:T(1,128)}', space=vmem, size = 0x9000, scoped, tag = 'internal scratch']
  %s0 = inlined_call_operand.hbm [shape: f32[2,1024], index: 0, kind: input, shape index: {}]
  %s1 = inlined_call_operand.hbm [shape: f32[1,1024], index: 1, kind: input, shape index: {}]
  %s2 = inlined_call_operand.hbm [shape: f32[1,1024], index: 2, kind: input, shape index: {}]
  %s3 = inlined_call_operand.hbm [shape: f32[2,1024], index: 3, kind: output, shape index: {}]
  %s4 = sld [smem:[#allocation0]]
  $region57: #{tpu_custom_call.1} parent=0
    _
  %s6 = ssub.s32 1, %s4
  %s7 = scalar_select 0, %s6, %s4
  $region1: #{tpu_custom_call.1} parent=0
    #allocation2 [shape = 'u8[32768]{0}', space=vmem, size = 0x8000, scoped, tag = 'input window, operand 0']
    #allocation3 [shape = 's32[2]{0}', space=sflag, size = 0x8, scoped, tag = 'scoped memory for tpu_custom_call.1']
    #allocation4 [shape = 's32[2]{0}', space=sflag, size = 0x8, scoped, tag = 'scoped memory for tpu_custom_call.1']
    #allocation5 [shape = 'u8[4096]{0}', space=vmem, size = 0x1000, scoped, tag = 'input window, operand 1']
    #allocation6 [shape = 's32[2]{0}', space=sflag, size = 0x8, scoped, tag = 'scoped memory for tpu_custom_call.1']
    #allocation7 [shape = 'u8[4096]{0}', space=vmem, size = 0x1000, scoped, tag = 'input window, operand 2']
    #allocation8 [shape = 'u8[32768]{0}', space=vmem, size = 0x8000, scoped, tag = 'output window, operand 0']
    %8 = vsyncpa [#allocation3], 0
    %s9 = scalar_lea.sflag [#allocation3], 1
    %10 = vsyncpa %s9, 0
    %11 = vsyncpa [#allocation6], 0
    %s12 = scalar_lea.sflag [#allocation6], 1
    %13 = vsyncpa %s12, 0
    %14 = vsyncpa [#allocation4], 0
    %s15 = scalar_lea.sflag [#allocation4], 1
    %16 = vsyncpa %s15, 0
    loop: start=0, step=1, limit=4
    $region2: #{tpu_custom_call.1} parent=1 // loop_pre_header
      _
    $region3: #{tpu_custom_call.1} parent=1 // loop_header
      %s18 = sphi 0, %s22
      %p19 = scmp.ge.s32.totalorder %s18, 4
      %s25 = sphi 0, %s37
      %s26 = sphi 0, %s33
      %s27 = sphi 0, %s25
      %s28 = sphi 0, %s26
      %s29 = sphi 0, %s27
      %s30 = sphi 0, %s28
      %s42 = sphi 0, %s44
      %s45 = sphi 0, %s42
      %s46 = sphi 0, %s45
      %s62 = sphi 0, %s46
      %s68 = sphi 0, %s70
      %s71 = sphi 0, %s68
      %s72 = sphi 0, %s71
      %s88 = sphi 0, %s72
      %s94 = sphi 0, %s96
      %s97 = sphi 0, %s94
      %s98 = sphi 0, %s97
      %s114 = sphi 0, %s98
      %s122 = sphi 0, %s124
      %s125 = sphi 0, %s122
      %s126 = sphi 0, %s125
      %s142 = sphi 0, %s126
    $region4: #{tpu_custom_call.1} parent=1 // loop_header_branch
      %21 = sbr.rel (%p19) target = $region8
    $region5: #{tpu_custom_call.1} parent=1 // loop_body
      %s23 = ssub.s32 %s18, 1
      %s24 = ssub.s32 %s18, 2
      %s31 = sadd.s32 1, %s26
      %p32 = scmp.ge.s32.totalorder %s31, 2
      %s33 = scalar_select %p32, 0, %s31
      %s34 = sadd.s32 1, %s25
      %s35 = scalar_select %p32, %s34, %s25
      %p36 = scmp.ge.s32.totalorder %s35, 1
      %s37 = scalar_select %p36, 0, %s35
      %s38 = ssub.s32 %s25, %s37
      %s39 = ssub.s32 %s26, %s33
      %s40 = sor.u32 %s38, %s39
      %p41 = scmp.eq.s32.totalorder %s40, 0
      %s43 = sadd.s32 %s42, 1
      %s44 = scalar_select %p41, %s42, %s43
      %p47 = pneg %p41
      %p48 = scmp.eq.s32.totalorder %s18, 1
      %p49 = por %p47, %p48
      %p50 = scmp.ne.s32.totalorder %s42, %s45
      %p51 = scmp.eq.s32.totalorder %s18, 0
      %p52 = por %p50, %p51
      %p53 = scmp.ne.s32.totalorder %s42, %s45
      %p54 = scmp.eq.s32.totalorder %s23, 1
      %p55 = por %p53, %p54
      %p56 = scmp.ne.s32.totalorder %s45, %s46
      %p57 = scmp.eq.s32.totalorder %s23, 0
      %p58 = por %p56, %p57
      %p59 = scmp.ne.s32.totalorder %s45, %s46
      %p60 = scmp.eq.s32.totalorder %s24, 1
      %p61 = por %p59, %p60
      %p63 = scmp.ne.s32.totalorder %s46, %s62
      %p64 = scmp.eq.s32.totalorder %s24, 0
      %p65 = por %p63, %p64
      %s66 = ssub.s32 %s26, %s33
      %p67 = scmp.eq.s32.totalorder %s66, 0
      %s69 = sadd.s32 %s68, 1
      %s70 = scalar_select %p67, %s68, %s69
      %p73 = pneg %p67
      %p74 = scmp.eq.s32.totalorder %s18, 1
      %p75 = por %p73, %p74
      %p76 = scmp.ne.s32.totalorder %s68, %s71
      %p77 = scmp.eq.s32.totalorder %s18, 0
      %p78 = por %p76, %p77
      %p79 = scmp.ne.s32.totalorder %s68, %s71
      %p80 = scmp.eq.s32.totalorder %s23, 1
      %p81 = por %p79, %p80
      %p82 = scmp.ne.s32.totalorder %s71, %s72
      %p83 = scmp.eq.s32.totalorder %s23, 0
      %p84 = por %p82, %p83
      %p85 = scmp.ne.s32.totalorder %s71, %s72
      %p86 = scmp.eq.s32.totalorder %s24, 1
      %p87 = por %p85, %p86
      %p89 = scmp.ne.s32.totalorder %s72, %s88
      %p90 = scmp.eq.s32.totalorder %s24, 0
      %p91 = por %p89, %p90
      %s92 = ssub.s32 %s26, %s33
      %p93 = scmp.eq.s32.totalorder %s92, 0
      %s95 = sadd.s32 %s94, 1
      %s96 = scalar_select %p93, %s94, %s95
      %p99 = pneg %p93
      %p100 = scmp.eq.s32.totalorder %s18, 1
      %p101 = por %p99, %p100
      %p102 = scmp.ne.s32.totalorder %s94, %s97
      %p103 = scmp.eq.s32.totalorder %s18, 0
      %p104 = por %p102, %p103
      %p105 = scmp.ne.s32.totalorder %s94, %s97
      %p106 = scmp.eq.s32.totalorder %s23, 1
      %p107 = por %p105, %p106
      %p108 = scmp.ne.s32.totalorder %s97, %s98
      %p109 = scmp.eq.s32.totalorder %s23, 0
      %p110 = por %p108, %p109
      %p111 = scmp.ne.s32.totalorder %s97, %s98
      %p112 = scmp.eq.s32.totalorder %s24, 1
      %p113 = por %p111, %p112
      %p115 = scmp.ne.s32.totalorder %s98, %s114
      %p116 = scmp.eq.s32.totalorder %s24, 0
      %p117 = por %p115, %p116
      %s118 = ssub.s32 %s25, %s37
      %s119 = ssub.s32 %s26, %s33
      %s120 = sor.u32 %s118, %s119
      %p121 = scmp.eq.s32.totalorder %s120, 0
      %s123 = sadd.s32 %s122, 1
      %s124 = scalar_select %p121, %s122, %s123
      %p127 = pneg %p121
      %p128 = scmp.eq.s32.totalorder %s18, 1
      %p129 = por %p127, %p128
      %p130 = scmp.ne.s32.totalorder %s122, %s125
      %p131 = scmp.eq.s32.totalorder %s18, 0
      %p132 = por %p130, %p131
      %p133 = scmp.ne.s32.totalorder %s122, %s125
      %p134 = scmp.eq.s32.totalorder %s23, 1
      %p135 = por %p133, %p134
      %p136 = scmp.ne.s32.totalorder %s125, %s126
      %p137 = scmp.eq.s32.totalorder %s23, 0
      %p138 = por %p136, %p137
      %p139 = scmp.ne.s32.totalorder %s125, %s126
      %p140 = scmp.eq.s32.totalorder %s24, 1
      %p141 = por %p139, %p140
      %p143 = scmp.ne.s32.totalorder %s126, %s142
      %p144 = scmp.eq.s32.totalorder %s24, 0
      %p145 = por %p143, %p144
      %p146 = scmp.le.s32.totalorder 1, %s18
      %p147 = scmp.lt.s32.totalorder %s18, 3
      %p148 = pnand %p146, %p147
      %p149 = pneg %p148
      // Predicated region
      $region9: #{tpu_custom_call.1} parent=5 // pred_check
        _
      $region10: #{tpu_custom_call.1} parent=5 // pred_check_branch
        %151 = sbr.rel (%p148) target = $region12
      $region11: #{tpu_custom_call.1} parent=5 // pred_region
        %s152 = ssub.s32 %s18, 1
      $region12: #{tpu_custom_call.1} parent=5 // pred_fallthru
        _
      %p153 = scmp.lt.s32.totalorder %s18, 2
      // Predicated region
      $region13: #{tpu_custom_call.1} parent=5 // pred_check
        %p154 = pneg %p153
      $region14: #{tpu_custom_call.1} parent=5 // pred_check_branch
        %156 = sbr.rel (%p154) target = $region16
      $region15: #{tpu_custom_call.1} parent=5 // pred_region
        // Predicated region
        $region17: #{tpu_custom_call.1} parent=15 // pred_check
          %p157 = pneg %p52
        $region18: #{tpu_custom_call.1} parent=15 // pred_check_branch
          %159 = sbr.rel (%p157) target = $region20
        $region19: #{tpu_custom_call.1} parent=15 // pred_region
          %s160 = sand.u32 %s42, 1
          %s161 = scalar_lea.sflag [#allocation3], %s160
          %s162 = sand.u32 %s42, 1
          %s163 = smul.addr %s162, 32
          %s164 = scalar_lea.vmem [#allocation2], %s163
          %s165 = smul.u32 4, %s25
          %s166 = smul.u32 4, %s26
          %s167 = ssub.s32 1, %s165
          %s168 = smul.u32 2, %s167
          %s169 = smul.u32 %s168, 4
          %s170 = ssub.s32 32, %s169
          %s171 = sshll.u32 %s170, 4
          %172 = vsyncadd %s161, %s171
          %p173 = scmp.ne.s32.totalorder 0, %s169
          %s174 = smul.addr %s165, 8
          %s175 = sadd.s32 %s166, %s174
          %s176 = smul.addr %s175, 2
          %s177 = scalar_lea.hbm %s0, %s176
          %s178 = smul.u32 8, %s167
          %s179 = sshll.u32 %s177, 4
          %s180 = int_to_ptr.hbm [resolvable:$true] %s179
          %s181 = sshll.u32 %s164, 4
          %s182 = int_to_ptr.vmem [resolvable:$true] %s181
          %s183 = sshll.u32 %s178, 4
          %187 = dma.hbm_to_vmem [thread:$0]  (%p173), %s180, %s183, %s182, %s161, 256, 128, 8
        $region20: #{tpu_custom_call.1} parent=15 // pred_fallthru
          _
        // Predicated region
        $region21: #{tpu_custom_call.1} parent=15 // pred_check
          %p188 = pneg %p78
        $region22: #{tpu_custom_call.1} parent=15 // pred_check_branch
          %190 = sbr.rel (%p188) target = $region24
        $region23: #{tpu_custom_call.1} parent=15 // pred_region
          %s191 = sand.u32 %s18, 1
          %s192 = scalar_lea.sflag [#allocation6], %s191
          %s193 = sand.u32 %s68, 1
          %s194 = smul.addr %s193, 4
          %s195 = scalar_lea.vmem [#allocation5], %s194
          %s196 = smul.u32 4, %s26
          %198 = vsyncadd %s192, 0
          %s199 = scalar_lea.hbm %s1, %s196
          %s201 = sshll.u32 %s199, 4
          %s202 = int_to_ptr.hbm [resolvable:$true] %s201
          %s203 = sshll.u32 %s195, 4
          %s204 = int_to_ptr.vmem [resolvable:$true] %s203
          %206 = dma.hbm_to_vmem [thread:$0]  %s202, 64, %s204, %s192
        $region24: #{tpu_custom_call.1} parent=15 // pred_fallthru
          _
        // Predicated region
        $region25: #{tpu_custom_call.1} parent=15 // pred_check
          %p207 = pneg %p104
        $region26: #{tpu_custom_call.1} parent=15 // pred_check_branch
          %209 = sbr.rel (%p207) target = $region28
        $region27: #{tpu_custom_call.1} parent=15 // pred_region
          %s210 = sand.u32 %s18, 1
          %s211 = scalar_lea.sflag [#allocation6], %s210
          %s212 = sand.u32 %s94, 1
          %s213 = smul.addr %s212, 4
          %s214 = scalar_lea.vmem [#allocation7], %s213
          %s215 = smul.u32 4, %s26
          %217 = vsyncadd %s211, 0
          %s218 = scalar_lea.hbm %s2, %s215
          %s220 = sshll.u32 %s218, 4
          %s221 = int_to_ptr.hbm [resolvable:$true] %s220
          %s222 = sshll.u32 %s214, 4
          %s223 = int_to_ptr.vmem [resolvable:$true] %s222
          %225 = dma.hbm_to_vmem [thread:$0]  %s221, 64, %s223, %s211
        $region28: #{tpu_custom_call.1} parent=15 // pred_fallthru
          _
      $region16: #{tpu_custom_call.1} parent=5 // pred_fallthru
        _
      %p226 = scmp.le.s32.totalorder 1, %s18
      %p227 = scmp.lt.s32.totalorder %s18, 3
      %p228 = pnand %p226, %p227
      %p229 = pneg %p228
      // Predicated region
      $region29: #{tpu_custom_call.1} parent=5 // pred_check
        _
      $region30: #{tpu_custom_call.1} parent=5 // pred_check_branch
        %231 = sbr.rel (%p228) target = $region32
      $region31: #{tpu_custom_call.1} parent=5 // pred_region
        %s232 = ssub.s32 %s18, 1
        %s233 = sand.u32 %s45, 1
        %s234 = scalar_lea.sflag [#allocation3], %s233
        %s235 = sand.u32 %s45, 1
        %s236 = smul.addr %s235, 32
        %s237 = scalar_lea.vmem [#allocation2], %s236
        // Predicated region
        $region33: #{tpu_custom_call.1} parent=31 // pred_check
          %p238 = pneg %p58
        $region34: #{tpu_custom_call.1} parent=31 // pred_check_branch
          %240 = sbr.rel (%p238) target = $region36
        $region35: #{tpu_custom_call.1} parent=31 // pred_region
          %242 = dma.done %s234, 512
        $region36: #{tpu_custom_call.1} parent=31 // pred_fallthru
          _
        %s243 = sand.u32 %s23, 1
        %s244 = scalar_lea.sflag [#allocation6], %s243
        %s245 = sand.u32 %s71, 1
        %s246 = smul.addr %s245, 4
        %s247 = scalar_lea.vmem [#allocation5], %s246
        // Predicated region
        $region37: #{tpu_custom_call.1} parent=31 // pred_check
          %p248 = pneg %p84
        $region38: #{tpu_custom_call.1} parent=31 // pred_check_branch
          %250 = sbr.rel (%p248) target = $region40
        $region39: #{tpu_custom_call.1} parent=31 // pred_region
          %252 = dma.done %s244, 64
        $region40: #{tpu_custom_call.1} parent=31 // pred_fallthru
          _
        %s253 = sand.u32 %s23, 1
        %s254 = scalar_lea.sflag [#allocation6], %s253
        %s255 = sand.u32 %s97, 1
        %s256 = smul.addr %s255, 4
        %s257 = scalar_lea.vmem [#allocation7], %s256
        // Predicated region
        $region41: #{tpu_custom_call.1} parent=31 // pred_check
          %p258 = pneg %p110
        $region42: #{tpu_custom_call.1} parent=31 // pred_check_branch
          %260 = sbr.rel (%p258) target = $region44
        $region43: #{tpu_custom_call.1} parent=31 // pred_region
          %262 = dma.done %s254, 64
        $region44: #{tpu_custom_call.1} parent=31 // pred_fallthru
          _
        %s263 = sand.u32 %s45, 1
        %s264 = scalar_lea.sflag [#allocation3], %s263
        %s265 = sand.u32 %s45, 1
        %s266 = smul.addr %s265, 32
        %s267 = scalar_lea.vmem [#allocation2], %s266
        %p268 = pneg %p58
        %p269 = pneg %p55
        %s270 = sand.u32 %s23, 1
        %s271 = scalar_lea.sflag [#allocation6], %s270
        %s272 = sand.u32 %s71, 1
        %s273 = smul.addr %s272, 4
        %s274 = scalar_lea.vmem [#allocation5], %s273
        %p275 = pneg %p84
        %p276 = pneg %p81
        %s277 = sand.u32 %s23, 1
        %s278 = scalar_lea.sflag [#allocation6], %s277
        %s279 = sand.u32 %s97, 1
        %s280 = smul.addr %s279, 4
        %s281 = scalar_lea.vmem [#allocation7], %s280
        %p282 = pneg %p110
        %p283 = pneg %p107
        %p284 = pneg %p138
        %p285 = pneg %p135
        %s286 = sand.u32 %s125, 1
        %s287 = scalar_lea.sflag [#allocation4], %s286
        %s288 = sand.u32 %s125, 1
        %s289 = smul.addr %s288, 32
        %s290 = scalar_lea.vmem [#allocation8], %s289
        %s291 = smul.u32 4, %s27
        %s292 = smul.u32 4, %s28
        %s293 = ssub.s32 1, %s291
        %s294 = smul.u32 2, %s293
        %s295 = smul.u32 %s294, 4
        %s296 = smul.u32 4, %s28
        %s297 = smul.u32 4, %s28
        %s298 = smul.u32 4, %s27
        %s299 = smul.u32 4, %s28
        %s300 = ssub.s32 1, %s298
        %s301 = smul.u32 2, %s300
        %s302 = smul.u32 %s301, 4
        %v303 = vld [vmem:[%s237] sm:$0xff]
        %v304 = vld [vmem:[%s237 + $0x8] sm:$0xff]
        %v305 = vld [vmem:[%s237 + $0x10] sm:$0xff]
        %v306 = vld [vmem:[%s237 + $0x18] sm:$0xff]
        %v307 = vld [vmem:[%s247] sm:$0xf]
        %v308 = vld [vmem:[%s257] sm:$0xf]
        %v310 = vperm.slane %v307, 0
        %v311 = vperm.slane %v307, 1
        %v312 = vperm.slane %v307, 2
        %v313 = vperm.slane %v307, 3
        %v314 = vrot.slane %v311, 6
        %v315 = vrot.slane %v312, 4
        %v316 = vrot.slane %v313, 2
        %vm317 = vcmask 1041408
        %v318 = vsel %vm317, %v310, %v314
        %vm319 = vcmask 1045508
        %v320 = vsel %vm319, %v315, %v316
        %vm321 = vcmask 1043456
        %v322 = vsel %vm321, %v318, %v320
        %vm323 = vcmask 1043458
        %v324 = vsel %vm323, %v310, %v314
        %vm325 = vcmask 1045504
        %v326 = vsel %vm325, %v316, %v315
        %vm327 = vcmask 1045506
        %v328 = vsel %vm327, %v324, %v326
        %v329 = vrot.slane %v328, 2
        %v330 = vsel %vm319, %v310, %v314
        %v331 = vsel %vm317, %v315, %v316
        %v332 = vsel %vm321, %v331, %v330
        %v333 = vrot.slane %v332, 4
        %v334 = vsel %vm325, %v314, %v310
        %v335 = vsel %vm323, %v315, %v316
        %v336 = vsel %vm327, %v335, %v334
        %v337 = vrot.slane %v336, 6
        %v342 = vsub.f32 %v303, %v322
        %v343 = vsub.f32 %v304, %v329
        %v344 = vsub.f32 %v305, %v333
        %v345 = vsub.f32 %v306, %v337
        %v347 = vperm.slane %v308, 0
        %v348 = vperm.slane %v308, 1
        %v349 = vperm.slane %v308, 2
        %v350 = vperm.slane %v308, 3
        %v351 = vrot.slane %v348, 6
        %v352 = vrot.slane %v349, 4
        %v353 = vrot.slane %v350, 2
        %v354 = vsel %vm317, %v347, %v351
        %v355 = vsel %vm319, %v352, %v353
        %v356 = vsel %vm321, %v354, %v355
        %v357 = vsel %vm323, %v347, %v351
        %v358 = vsel %vm325, %v353, %v352
        %v359 = vsel %vm327, %v357, %v358
        %v360 = vrot.slane %v359, 2
        %v361 = vsel %vm319, %v347, %v351
        %v362 = vsel %vm317, %v352, %v353
        %v363 = vsel %vm321, %v362, %v361
        %v364 = vrot.slane %v363, 4
        %v365 = vsel %vm325, %v351, %v347
        %v366 = vsel %vm323, %v352, %v353
        %v367 = vsel %vm327, %v366, %v365
        %v368 = vrot.slane %v367, 6
        %v373 = vmul.f32 %v342, %v356
        %v374 = vmul.f32 %v343, %v360
        %v375 = vmul.f32 %v344, %v364
        %v376 = vmul.f32 %v345, %v368
        %377 = vst [vmem:[%s290] sm:$0xff] %v373
        %378 = vst [vmem:[%s290 + $0x8] sm:$0xff] %v374
        %379 = vst [vmem:[%s290 + $0x10] sm:$0xff] %v375
        %380 = vst [vmem:[%s290 + $0x18] sm:$0xff] %v376
        %s381 = sand.u32 %s125, 1
        %s382 = scalar_lea.sflag [#allocation4], %s381
        %s383 = sand.u32 %s125, 1
        %s384 = smul.addr %s383, 32
        %s385 = scalar_lea.vmem [#allocation8], %s384
        // Predicated region
        $region45: #{tpu_custom_call.1} parent=31 // pred_check
          %p386 = pneg %p135
        $region46: #{tpu_custom_call.1} parent=31 // pred_check_branch
          %388 = sbr.rel (%p386) target = $region48
        $region47: #{tpu_custom_call.1} parent=31 // pred_region
          %s389 = smul.u32 4, %s27
          %s390 = smul.u32 4, %s28
          %s391 = ssub.s32 1, %s389
          %s392 = smul.u32 2, %s391
          %s393 = smul.u32 %s392, 4
          %s394 = ssub.s32 32, %s393
          %s395 = sshll.u32 %s394, 4
          %396 = vsyncadd %s382, %s395
          %p397 = scmp.ne.s32.totalorder 0, %s393
          %s398 = smul.addr %s389, 8
          %s399 = sadd.s32 %s390, %s398
          %s400 = smul.addr %s399, 2
          %s401 = scalar_lea.hbm %s3, %s400
          %s402 = smul.u32 8, %s391
          %s403 = sshll.u32 %s385, 4
          %s404 = int_to_ptr.vmem [resolvable:$true] %s403
          %s405 = sshll.u32 %s401, 4
          %s406 = int_to_ptr.hbm [resolvable:$true] %s405
          %s407 = sshll.u32 %s402, 4
          %411 = dma.vmem_to_hbm [thread:$0]  (%p397), %s404, %s407, %s406, %s382, 128, 256, 8
        $region48: #{tpu_custom_call.1} parent=31 // pred_fallthru
          _
      $region32: #{tpu_custom_call.1} parent=5 // pred_fallthru
        _
      %p412 = scmp.le.s32.totalorder 2, %s18
      // Predicated region
      $region49: #{tpu_custom_call.1} parent=5 // pred_check
        %p413 = pneg %p412
      $region50: #{tpu_custom_call.1} parent=5 // pred_check_branch
        %415 = sbr.rel (%p413) target = $region52
      $region51: #{tpu_custom_call.1} parent=5 // pred_region
        %s416 = ssub.s32 %s18, 2
        // Predicated region
        $region53: #{tpu_custom_call.1} parent=51 // pred_check
          %p417 = pneg %p141
        $region54: #{tpu_custom_call.1} parent=51 // pred_check_branch
          %419 = sbr.rel (%p417) target = $region56
        $region55: #{tpu_custom_call.1} parent=51 // pred_region
          %s420 = sand.u32 %s126, 1
          %s421 = scalar_lea.sflag [#allocation4], %s420
          %s422 = sand.u32 %s126, 1
          %s423 = smul.addr %s422, 32
          %s424 = scalar_lea.vmem [#allocation8], %s423
          %426 = dma.done %s421, 512
        $region56: #{tpu_custom_call.1} parent=51 // pred_fallthru
          _
      $region52: #{tpu_custom_call.1} parent=5 // pred_fallthru
        _
    $region6: #{tpu_custom_call.1} parent=1 // loop_footer
      %s22 = sadd.s32 1, %s18
    $region7: #{tpu_custom_call.1} parent=1 // loop_footer_branch
      %17 = sbr.rel target = $region3
    $region8: #{tpu_custom_call.1} parent=1 // loop_exit
      _
    %427 = vsyncpa [#allocation3], 1
    %s428 = scalar_lea.sflag [#allocation3], 1
    %429 = vsyncpa %s428, 1
    %430 = vsyncpa [#allocation6], 1
    %s431 = scalar_lea.sflag [#allocation6], 1
    %432 = vsyncpa %s431, 1
    %433 = vsyncpa [#allocation4], 1
    %s434 = scalar_lea.sflag [#allocation4], 1
    %435 = vsyncpa %s434, 1

</llo_original>
